<compile_context>
chip_gen: v7x
topology: tpu7x:2x2x1
jax: 0.10.0
libtpu: 0.0.40
codegen_flags: <defaults>
</compile_context>

<pallas_src>
import functools

import jax
import jax.numpy as jnp
import numpy as np
from jax.experimental import pallas as pl
from jax.experimental.pallas import tpu as pltpu

BETA_L, BETA_M, BETA_S = 0.63, 0.32, 0.05
_Y_MAX = 10000.0
_LANE = 128
_SUB = 8


def _color_params(cvd_type):
    """Host-side constants, baked into the kernel as immediates.

    Returns (cmat_scaled, thr):
      cmat_scaled[c][k] = (xyz2lms @ rgb2xyz with CVD substitution)[c][k] / thr[c]
      thr[c]            = per-channel quantization threshold
    so the kernel computes  round(cmat_scaled . rgb) * thr  per channel.
    """
    rgb2xyz = np.array(
        [[0.4124, 0.3576, 0.1805],
         [0.2126, 0.7152, 0.0722],
         [0.0193, 0.1192, 0.9505]], dtype=np.float64)
    xyz2lms = np.array(
        [[0.34 * BETA_L, 0.69 * BETA_L, -0.076 * BETA_L],
         [-0.39 * BETA_M, 1.17 * BETA_M, 0.049 * BETA_M],
         [0.038 * BETA_S, -0.043 * BETA_S, 0.48 * BETA_S]], dtype=np.float64)
    C = xyz2lms @ rgb2xyz  # linear RGB -> aLMS in one 3x3

    # Fold the CVD channel substitution (incl. partial-degree variants) into C.
    if cvd_type == "protan":
        C[0, :] = C[1, :] / BETA_M * BETA_L
    elif cvd_type == "deutan":
        C[1, :] = C[0, :] / BETA_L * BETA_M
    elif cvd_type.startswith("protan_"):
        d = int(cvd_type.split("_")[1]) / 100.0
        C[0, :] = d * C[1, :] / BETA_M * BETA_L + (1.0 - d) * C[0, :]
    elif cvd_type.startswith("deutan_"):
        d = int(cvd_type.split("_")[1]) / 100.0
        C[1, :] = d * C[0, :] / BETA_L * BETA_M + (1.0 - d) * C[1, :]
    # any other string: no substitution (same fall-through as the PyTorch code)

    thr = np.sqrt(np.array([0.586, 0.293, 0.025], np.float64) * _Y_MAX) / _Y_MAX
    C_scaled = (C / thr[:, None]).astype(np.float32)     # fold 1/thr into the rows
    thr = thr.astype(np.float32)

    cmat_scaled = tuple(tuple(float(v) for v in row) for row in C_scaled)
    return cmat_scaled, tuple(float(v) for v in thr)


def _cvd_kernel(x_ref, o_ref, *, cmat_scaled, thr):
    # x_ref / o_ref: (3, TR, 128) blocks (batch dim squeezed away).
    x = x_ref[...].astype(jnp.float32)

    # sRGB -> linear RGB (gamma expansion); multiply-by-reciprocal, no divides.
    lin = jnp.where(x <= 0.04045,
                    x * (1.0 / 12.92),
                    ((x + 0.055) * (1.0 / 1.055)) ** 2.4)
    r = lin[0]  # (TR, 128), dense
    g = lin[1]
    b = lin[2]

    # Fused linearRGB -> aLMS (+ CVD substitution + 1/thr), then quantize/abs/clamp.
    # Kept as scalar-constant multiply-adds on the VPU: a 3-wide contraction on
    # the MXU would pad to a 128/256-wide tile and force a relayout.
    for c in range(3):
        v = cmat_scaled[c][0] * r + cmat_scaled[c][1] * g + cmat_scaled[c][2] * b
        q = jnp.round(v) * thr[c]
        o_ref[c, :, :] = jnp.minimum(jnp.abs(q), 1.0).astype(o_ref.dtype)


def cvd_simulate(image_srgb, cvd_type="protan", tile_rows=1024,
                 out_dtype=jnp.float32):
    """image_srgb: [B, 3, H, W] float in [0, 1] (NCHW, batched_input=True)."""
    B, C, H, W = image_srgb.shape
    assert C == 3
    hw = H * W

    rows = pl.cdiv(hw, _LANE)          # rows of 128 lanes needed
    padded_hw = rows * _LANE

    x = image_srgb.reshape(B, 3, hw)   # native dtype, cast happens in-kernel
    if padded_hw != hw:
        # Only pad up to the next 128 multiple (not a tile multiple); skipped
        # entirely for 128-divisible pixel counts.
        x = jnp.pad(x, ((0, 0), (0, 0), (0, padded_hw - hw)))
    x = x.reshape(B, 3, rows, _LANE)

    # Tile rows: biggest that fits comfortably, multiple of 8 unless it covers
    # the whole (possibly tiny) array.
    tr = min(tile_rows, rows)
    if tr < rows:
        tr = ((tr + _SUB - 1) // _SUB) * _SUB
    # v7x has 2 TensorCores: make sure the parallel grid has >= 2 blocks.
    if B * pl.cdiv(rows, tr) < 2 and rows > _SUB:
        tr = ((pl.cdiv(rows, 2) + _SUB - 1) // _SUB) * _SUB

    cmat_scaled, thr = _color_params(cvd_type)
    kernel = functools.partial(_cvd_kernel, cmat_scaled=cmat_scaled, thr=thr)

    block = (None, 3, tr, _LANE)  # None => batch dim squeezed in the kernel
    out = pl.pallas_call(
        kernel,
        out_shape=jax.ShapeDtypeStruct((B, 3, rows, _LANE), out_dtype),
        grid=(B, pl.cdiv(rows, tr)),
        in_specs=[pl.BlockSpec(block, lambda bb, i: (bb, 0, i, 0))],
        out_specs=pl.BlockSpec(block, lambda bb, i: (bb, 0, i, 0)),
        compiler_params=pltpu.CompilerParams(
            dimension_semantics=("parallel", "parallel")),
    )(x)

    out = out.reshape(B, 3, padded_hw)
    if padded_hw != hw:
        out = out[:, :, :hw]
    return out.reshape(B, 3, H, W)


def _reference(image_srgb, cvd_type="protan"):
    """Pure-JAX reference mirroring the PyTorch forward (two separate f32
    einsums, division by thresholds) for validation."""
    rgb2xyz = jnp.array(
        [[0.4124, 0.3576, 0.1805],
         [0.2126, 0.7152, 0.0722],
         [0.0193, 0.1192, 0.9505]], jnp.float32)
    xyz2lms = jnp.array(
        [[0.34 * BETA_L, 0.69 * BETA_L, -0.076 * BETA_L],
         [-0.39 * BETA_M, 1.17 * BETA_M, 0.049 * BETA_M],
         [0.038 * BETA_S, -0.043 * BETA_S, 0.48 * BETA_S]], jnp.float32)
    x = image_srgb.astype(jnp.float32)
    lin = jnp.where(x <= 0.04045, x / 12.92, ((x + 0.055) / 1.055) ** 2.4)
    xyz = jnp.einsum("vi,biju->bvju", rgb2xyz, lin)
    alms = jnp.einsum("vi,biju->bvju", xyz2lms, xyz)
    if cvd_type == "protan":
        alms = alms.at[:, 0].set(alms[:, 1] / BETA_M * BETA_L)
    elif cvd_type == "deutan":
        alms = alms.at[:, 1].set(alms[:, 0] / BETA_L * BETA_M)
    elif cvd_type.startswith("protan_"):
        d = int(cvd_type.split("_")[1]) / 100.0
        alms = alms.at[:, 0].set(d * alms[:, 1] / BETA_M * BETA_L + (1 - d) * alms[:, 0])
    elif cvd_type.startswith("deutan_"):
        d = int(cvd_type.split("_")[1]) / 100.0
        alms = alms.at[:, 1].set(d * alms[:, 0] / BETA_L * BETA_M + (1 - d) * alms[:, 1])
    thr = jnp.sqrt(jnp.array([0.586, 0.293, 0.025], jnp.float32) * _Y_MAX) / _Y_MAX
    t = thr.reshape(1, 3, 1, 1)
    q = jnp.round(alms / t) * t
    return jnp.clip(jnp.abs(q), 0.0, 1.0)


def _check(x, cvd_type):
    out = np.asarray(jax.block_until_ready(cvd_simulate(x, cvd_type=cvd_type)))
    ref = np.asarray(jax.block_until_ready(_reference(x, cvd_type=cvd_type)))
    diff = np.abs(out - ref)
    # Accepted deviation (documented, not noise): the kernel fuses the two 3x3
    # matrices and the reciprocal thresholds on the host in double precision,
    # so a pixel sitting exactly on a round() boundary may land one
    # quantization step away from the unfused f32 reference.  Everything else
    # must match to 1e-5, and such boundary pixels must be rare.
    thr_np = (np.sqrt(np.array([0.586, 0.293, 0.025], np.float32) * _Y_MAX)
              / _Y_MAX).reshape(1, 3, 1, 1)
    within_tol = diff <= 1e-5
    within_step = np.abs(diff - thr_np) <= 1e-5
    assert np.all(within_tol | within_step), float(diff.max())
    assert within_tol.mean() > 0.99, float(within_tol.mean())


if __name__ == "__main__":
    key = jax.random.PRNGKey(0)
    k1, k2 = jax.random.split(key)

    # Main case: H*W divisible by 128 -> no pad, no output slice.
    x = jax.random.uniform(k1, (2, 3, 16, 16), dtype=jnp.float32)
    _check(x, "protan")

    # Ragged case: H*W not divisible by 128 -> minimal pad-to-128 path.
    x2 = jax.random.uniform(k2, (1, 3, 10, 10), dtype=jnp.float32)
    _check(x2, "deutan")

    # TODO(synk): the zero-scaled Gaussian noise and the straight-through
    # (detach) trick only affect gradients, which Pallas forward kernels do
    # not model; forward output is identical without them.
    print("KERNEL_OK")
</pallas_src>

<mosaic_0001>
module attributes {stable_mosaic.version = 11 : i64} {
  func.func @_cvd_kernel(%arg0: i32, %arg1: i32, %arg2: memref<1x3x2x128xf32, #tpu.memory_space<vmem>>, %arg3: memref<1x3x2x128xf32, #tpu.memory_space<vmem>>) attributes {dimension_semantics = [#tpu.dimension_semantics<parallel>, #tpu.dimension_semantics<parallel>], iteration_bounds = array<i64: 2, 1>, scalar_prefetch = 0 : i64, scratch_operands = 0 : i64, tpu.core_type = #tpu.core_type<tc>, window_params = [{transform_indices = @transform_0, window_bounds = array<i64: 1, 3, 2, 128>}, {transform_indices = @transform_1, window_bounds = array<i64: 1, 3, 2, 128>}]} {
    %c0 = arith.constant 0 : index
    %c0_0 = arith.constant 0 : index
    %c0_1 = arith.constant 0 : index
    %c0_2 = arith.constant 0 : index
    %0 = vector.load %arg2[%c0, %c0_0, %c0_1, %c0_2] : memref<1x3x2x128xf32, #tpu.memory_space<vmem>>, vector<1x3x2x128xf32>
    %1 = vector.shape_cast %0 : vector<1x3x2x128xf32> to vector<3x2x128xf32>
    %cst = arith.constant 4.045000e-02 : f32
    %2 = vector.broadcast %cst : f32 to vector<3x2x128xf32>
    %3 = arith.cmpf ole, %1, %2 : vector<3x2x128xf32>
    %cst_3 = arith.constant 0.0773993805 : f32
    %4 = vector.broadcast %cst_3 : f32 to vector<3x2x128xf32>
    %5 = arith.mulf %1, %4 : vector<3x2x128xf32>
    %cst_4 = arith.constant 5.500000e-02 : f32
    %6 = vector.broadcast %cst_4 : f32 to vector<3x2x128xf32>
    %7 = arith.addf %1, %6 : vector<3x2x128xf32>
    %cst_5 = arith.constant 0.947867274 : f32
    %8 = vector.broadcast %cst_5 : f32 to vector<3x2x128xf32>
    %9 = arith.mulf %7, %8 : vector<3x2x128xf32>
    %cst_6 = arith.constant 2.400000e+00 : f32
    %10 = vector.broadcast %cst_6 : f32 to vector<3x2x128xf32>
    %11 = math.powf %9, %10 : vector<3x2x128xf32>
    %12 = arith.select %3, %5, %11 : vector<3x2x128xi1>, vector<3x2x128xf32>
    %13 = vector.extract_strided_slice %12 {offsets = [0, 0, 0], sizes = [1, 2, 128], strides = [1, 1, 1]} : vector<3x2x128xf32> to vector<1x2x128xf32>
    %14 = vector.shape_cast %13 : vector<1x2x128xf32> to vector<2x128xf32>
    %15 = vector.extract_strided_slice %12 {offsets = [1, 0, 0], sizes = [1, 2, 128], strides = [1, 1, 1]} : vector<3x2x128xf32> to vector<1x2x128xf32>
    %16 = vector.shape_cast %15 : vector<1x2x128xf32> to vector<2x128xf32>
    %17 = vector.extract_strided_slice %12 {offsets = [2, 0, 0], sizes = [1, 2, 128], strides = [1, 1, 1]} : vector<3x2x128xf32> to vector<1x2x128xf32>
    %18 = vector.shape_cast %17 : vector<1x2x128xf32> to vector<2x128xf32>
    %cst_7 = arith.constant 7.31235886 : f32
    %19 = vector.broadcast %cst_7 : f32 to vector<2x128xf32>
    %20 = arith.mulf %19, %14 : vector<2x128xf32>
    %cst_8 = arith.constant 57.8690567 : f32
    %21 = vector.broadcast %cst_8 : f32 to vector<2x128xf32>
    %22 = arith.mulf %21, %16 : vector<2x128xf32>
    %23 = arith.addf %20, %22 : vector<2x128xf32>
    %cst_9 = arith.constant 4.991690e+00 : f32
    %24 = vector.broadcast %cst_9 : f32 to vector<2x128xf32>
    %25 = arith.mulf %24, %18 : vector<2x128xf32>
    %26 = arith.addf %23, %25 : vector<2x128xf32>
    %27 = math.roundeven %26 : vector<2x128xf32>
    %cst_10 = arith.constant 0.00765506364 : f32
    %28 = vector.broadcast %cst_10 : f32 to vector<2x128xf32>
    %29 = arith.mulf %27, %28 : vector<2x128xf32>
    %30 = math.absf %29 : vector<2x128xf32>
    %cst_11 = arith.constant 1.000000e+00 : f32
    %31 = vector.broadcast %cst_11 : f32 to vector<2x128xf32>
    %32 = arith.minimumf %30, %31 : vector<2x128xf32>
    %c0_12 = arith.constant 0 : index
    %c0_13 = arith.constant 0 : index
    %c0_14 = arith.constant 0 : index
    %c0_15 = arith.constant 0 : index
    %33 = vector.load %arg3[%c0_12, %c0_13, %c0_14, %c0_15] : memref<1x3x2x128xf32, #tpu.memory_space<vmem>>, vector<1x1x2x128xf32>
    %34 = vector.shape_cast %33 : vector<1x1x2x128xf32> to vector<2x128xf32>
    %35 = vector.shape_cast %32 : vector<2x128xf32> to vector<1x1x2x128xf32>
    tpu.vector_store %arg3[%c0_12, %c0_13, %c0_14, %c0_15], %35 {strides = array<i32>} : memref<1x3x2x128xf32, #tpu.memory_space<vmem>>, vector<1x1x2x128xf32>,
    %cst_16 = arith.constant 5.25269175 : f32
    %36 = vector.broadcast %cst_16 : f32 to vector<2x128xf32>
    %37 = arith.mulf %36, %14 : vector<2x128xf32>
    %cst_17 = arith.constant 41.5691185 : f32
    %38 = vector.broadcast %cst_17 : f32 to vector<2x128xf32>
    %39 = arith.mulf %38, %16 : vector<2x128xf32>
    %40 = arith.addf %37, %39 : vector<2x128xf32>
    %cst_18 = arith.constant 3.58568406 : f32
    %41 = vector.broadcast %cst_18 : f32 to vector<2x128xf32>
    %42 = arith.mulf %41, %18 : vector<2x128xf32>
    %43 = arith.addf %40, %42 : vector<2x128xf32>
    %44 = math.roundeven %43 : vector<2x128xf32>
    %cst_19 = arith.constant 0.00541294739 : f32
    %45 = vector.broadcast %cst_19 : f32 to vector<2x128xf32>
    %46 = arith.mulf %44, %45 : vector<2x128xf32>
    %47 = math.absf %46 : vector<2x128xf32>
    %cst_20 = arith.constant 1.000000e+00 : f32
    %48 = vector.broadcast %cst_20 : f32 to vector<2x128xf32>
    %49 = arith.minimumf %47, %48 : vector<2x128xf32>
    %c0_21 = arith.constant 0 : index
    %c1 = arith.constant 1 : index
    %c0_22 = arith.constant 0 : index
    %c0_23 = arith.constant 0 : index
    %50 = vector.load %arg3[%c0_21, %c1, %c0_22, %c0_23] : memref<1x3x2x128xf32, #tpu.memory_space<vmem>>, vector<1x1x2x128xf32>
    %51 = vector.shape_cast %50 : vector<1x1x2x128xf32> to vector<2x128xf32>
    %52 = vector.shape_cast %49 : vector<2x128xf32> to vector<1x1x2x128xf32>
    tpu.vector_store %arg3[%c0_21, %c1, %c0_22, %c0_23], %52 {strides = array<i32>} : memref<1x3x2x128xf32, #tpu.memory_space<vmem>>, vector<1x1x2x128xf32>,
    %cst_24 = arith.constant 0.499431163 : f32
    %53 = vector.broadcast %cst_24 : f32 to vector<2x128xf32>
    %54 = arith.mulf %53, %14 : vector<2x128xf32>
    %cst_25 = arith.constant 1.26653016 : f32
    %55 = vector.broadcast %cst_25 : f32 to vector<2x128xf32>
    %56 = arith.mulf %55, %16 : vector<2x128xf32>
    %57 = arith.addf %54, %56 : vector<2x128xf32>
    %cst_26 = arith.constant 1.454630e+01 : f32
    %58 = vector.broadcast %cst_26 : f32 to vector<2x128xf32>
    %59 = arith.mulf %58, %18 : vector<2x128xf32>
    %60 = arith.addf %57, %59 : vector<2x128xf32>
    %61 = math.roundeven %60 : vector<2x128xf32>
    %cst_27 = arith.constant 0.00158113881 : f32
    %62 = vector.broadcast %cst_27 : f32 to vector<2x128xf32>
    %63 = arith.mulf %61, %62 : vector<2x128xf32>
    %64 = math.absf %63 : vector<2x128xf32>
    %cst_28 = arith.constant 1.000000e+00 : f32
    %65 = vector.broadcast %cst_28 : f32 to vector<2x128xf32>
    %66 = arith.minimumf %64, %65 : vector<2x128xf32>
    %c0_29 = arith.constant 0 : index
    %c2 = arith.constant 2 : index
    %c0_30 = arith.constant 0 : index
    %c0_31 = arith.constant 0 : index
    %67 = vector.load %arg3[%c0_29, %c2, %c0_30, %c0_31] : memref<1x3x2x128xf32, #tpu.memory_space<vmem>>, vector<1x1x2x128xf32>
    %68 = vector.shape_cast %67 : vector<1x1x2x128xf32> to vector<2x128xf32>
    %69 = vector.shape_cast %66 : vector<2x128xf32> to vector<1x1x2x128xf32>
    tpu.vector_store %arg3[%c0_29, %c2, %c0_30, %c0_31], %69 {strides = array<i32>} : memref<1x3x2x128xf32, #tpu.memory_space<vmem>>, vector<1x1x2x128xf32>,
    return
  }
  func.func @transform_0(%arg0: i32, %arg1: i32) -> (i32, i32, i32, i32) {
    %c0_i32 = arith.constant 0 : i32
    %c0_i32_0 = arith.constant 0 : i32
    %c0_i32_1 = arith.constant 0 : i32
    return %arg0, %c0_i32, %arg1, %c0_i32_0 : i32, i32, i32, i32
  }
  func.func @transform_1(%arg0: i32, %arg1: i32) -> (i32, i32, i32, i32) {
    %c0_i32 = arith.constant 0 : i32
    %c0_i32_0 = arith.constant 0 : i32
    %c0_i32_1 = arith.constant 0 : i32
    return %arg0, %c0_i32, %arg1, %c0_i32_0 : i32, i32, i32, i32
  }
}

</mosaic_0001>

<llo_original>
// kernel: tpu_custom_call.1
$region0: #{tpu_custom_call.1}
  #allocation0 [shape = 'u32[]', space=smem, size = 0x4, offset = 0x4, fixed_abs, tag = 'smem constant byte address 0x4 - core index']
  #allocation1 [shape = 'u32[144,128]{1,0:T(1,128)}', space=vmem, size = 0x12000, scoped, tag = 'internal scratch']
  %s0 = inlined_call_operand.hbm [shape: f32[2,3,2,128], index: 0, kind: input, shape index: {}]
  %s1 = inlined_call_operand.hbm [shape: f32[2,3,2,128], index: 1, kind: output, shape index: {}]
  %s2 = sld [smem:[#allocation0]]
  $region41: #{tpu_custom_call.1} parent=0
    _
  %s4 = ssub.s32 1, %s2
  %s5 = scalar_select 0, %s4, %s2
  $region1: #{tpu_custom_call.1} parent=0
    #allocation2 [shape = 'u8[6144]{0}', space=vmem, size = 0x1800, scoped, tag = 'input window, operand 0']
    #allocation3 [shape = 's32[2]{0}', space=sflag, size = 0x8, scoped, tag = 'scoped memory for tpu_custom_call.1']
    #allocation4 [shape = 's32[2]{0}', space=sflag, size = 0x8, scoped, tag = 'scoped memory for tpu_custom_call.1']
    #allocation5 [shape = 'u8[6144]{0}', space=vmem, size = 0x1800, scoped, tag = 'output window, operand 0']
    %6 = vsyncpa [#allocation3], 0
    %s7 = scalar_lea.sflag [#allocation3], 1
    %8 = vsyncpa %s7, 0
    %9 = vsyncpa [#allocation4], 0
    %s10 = scalar_lea.sflag [#allocation4], 1
    %11 = vsyncpa %s10, 0
    loop: start=0, step=1, limit=4
    $region2: #{tpu_custom_call.1} parent=1 // loop_pre_header
      _
    $region3: #{tpu_custom_call.1} parent=1 // loop_header
      %s13 = sphi 0, %s17
      %p14 = scmp.ge.s32.totalorder %s13, 4
      %s20 = sphi 0, %s32
      %s21 = sphi 0, %s28
      %s22 = sphi 0, %s20
      %s23 = sphi 0, %s21
      %s24 = sphi 0, %s22
      %s25 = sphi 0, %s23
      %s37 = sphi 0, %s39
      %s40 = sphi 0, %s37
      %s41 = sphi 0, %s40
      %s57 = sphi 0, %s41
      %s65 = sphi 0, %s67
      %s68 = sphi 0, %s65
      %s69 = sphi 0, %s68
      %s85 = sphi 0, %s69
    $region4: #{tpu_custom_call.1} parent=1 // loop_header_branch
      %16 = sbr.rel (%p14) target = $region8
    $region5: #{tpu_custom_call.1} parent=1 // loop_body
      %s18 = ssub.s32 %s13, 1
      %s19 = ssub.s32 %s13, 2
      %s26 = sadd.s32 1, %s21
      %p27 = scmp.ge.s32.totalorder %s26, 1
      %s28 = scalar_select %p27, 0, %s26
      %s29 = sadd.s32 1, %s20
      %s30 = scalar_select %p27, %s29, %s20
      %p31 = scmp.ge.s32.totalorder %s30, 2
      %s32 = scalar_select %p31, 0, %s30
      %s33 = ssub.s32 %s20, %s32
      %s34 = ssub.s32 %s21, %s28
      %s35 = sor.u32 %s33, %s34
      %p36 = scmp.eq.s32.totalorder %s35, 0
      %s38 = sadd.s32 %s37, 1
      %s39 = scalar_select %p36, %s37, %s38
      %p42 = pneg %p36
      %p43 = scmp.eq.s32.totalorder %s13, 1
      %p44 = por %p42, %p43
      %p45 = scmp.ne.s32.totalorder %s37, %s40
      %p46 = scmp.eq.s32.totalorder %s13, 0
      %p47 = por %p45, %p46
      %p48 = scmp.ne.s32.totalorder %s37, %s40
      %p49 = scmp.eq.s32.totalorder %s18, 1
      %p50 = por %p48, %p49
      %p51 = scmp.ne.s32.totalorder %s40, %s41
      %p52 = scmp.eq.s32.totalorder %s18, 0
      %p53 = por %p51, %p52
      %p54 = scmp.ne.s32.totalorder %s40, %s41
      %p55 = scmp.eq.s32.totalorder %s19, 1
      %p56 = por %p54, %p55
      %p58 = scmp.ne.s32.totalorder %s41, %s57
      %p59 = scmp.eq.s32.totalorder %s19, 0
      %p60 = por %p58, %p59
      %s61 = ssub.s32 %s20, %s32
      %s62 = ssub.s32 %s21, %s28
      %s63 = sor.u32 %s61, %s62
      %p64 = scmp.eq.s32.totalorder %s63, 0
      %s66 = sadd.s32 %s65, 1
      %s67 = scalar_select %p64, %s65, %s66
      %p70 = pneg %p64
      %p71 = scmp.eq.s32.totalorder %s13, 1
      %p72 = por %p70, %p71
      %p73 = scmp.ne.s32.totalorder %s65, %s68
      %p74 = scmp.eq.s32.totalorder %s13, 0
      %p75 = por %p73, %p74
      %p76 = scmp.ne.s32.totalorder %s65, %s68
      %p77 = scmp.eq.s32.totalorder %s18, 1
      %p78 = por %p76, %p77
      %p79 = scmp.ne.s32.totalorder %s68, %s69
      %p80 = scmp.eq.s32.totalorder %s18, 0
      %p81 = por %p79, %p80
      %p82 = scmp.ne.s32.totalorder %s68, %s69
      %p83 = scmp.eq.s32.totalorder %s19, 1
      %p84 = por %p82, %p83
      %p86 = scmp.ne.s32.totalorder %s69, %s85
      %p87 = scmp.eq.s32.totalorder %s19, 0
      %p88 = por %p86, %p87
      %p89 = scmp.le.s32.totalorder 1, %s13
      %p90 = scmp.lt.s32.totalorder %s13, 3
      %p91 = pnand %p89, %p90
      %p92 = pneg %p91
      // Predicated region
      $region9: #{tpu_custom_call.1} parent=5 // pred_check
        _
      $region10: #{tpu_custom_call.1} parent=5 // pred_check_branch
        %94 = sbr.rel (%p91) target = $region12
      $region11: #{tpu_custom_call.1} parent=5 // pred_region
        %s95 = ssub.s32 %s13, 1
      $region12: #{tpu_custom_call.1} parent=5 // pred_fallthru
        _
      %p96 = scmp.lt.s32.totalorder %s13, 2
      // Predicated region
      $region13: #{tpu_custom_call.1} parent=5 // pred_check
        %p97 = pneg %p96
      $region14: #{tpu_custom_call.1} parent=5 // pred_check_branch
        %99 = sbr.rel (%p97) target = $region16
      $region15: #{tpu_custom_call.1} parent=5 // pred_region
        // Predicated region
        $region17: #{tpu_custom_call.1} parent=15 // pred_check
          %p100 = pneg %p47
        $region18: #{tpu_custom_call.1} parent=15 // pred_check_branch
          %102 = sbr.rel (%p100) target = $region20
        $region19: #{tpu_custom_call.1} parent=15 // pred_region
          %s103 = sand.u32 %s37, 1
          %s104 = scalar_lea.sflag [#allocation3], %s103
          %s105 = sand.u32 %s37, 1
          %s106 = smul.addr %s105, 6
          %s107 = scalar_lea.vmem [#allocation2], %s106
          %s109 = ssub.s32 96, 96
          %110 = vsyncadd %s104, %s109
          %s111 = smul.addr %s20, 3
          %s112 = sadd.s32 %s21, %s111
          %s113 = smul.addr %s112, 32
          %s114 = scalar_lea.hbm %s0, %s113
          %s115 = sshll.u32 %s107, 4
          %s116 = int_to_ptr.vmem [resolvable:$true] %s115
          %121 = dma.hbm_to_vmem [thread:$0]  %s114, 96, %s116, %s104, 32, 32, 2
        $region20: #{tpu_custom_call.1} parent=15 // pred_fallthru
          _
      $region16: #{tpu_custom_call.1} parent=5 // pred_fallthru
        _
      %p122 = scmp.le.s32.totalorder 1, %s13
      %p123 = scmp.lt.s32.totalorder %s13, 3
      %p124 = pnand %p122, %p123
      %p125 = pneg %p124
      // Predicated region
      $region21: #{tpu_custom_call.1} parent=5 // pred_check
        _
      $region22: #{tpu_custom_call.1} parent=5 // pred_check_branch
        %127 = sbr.rel (%p124) target = $region24
      $region23: #{tpu_custom_call.1} parent=5 // pred_region
        %s128 = ssub.s32 %s13, 1
        %s129 = sand.u32 %s40, 1
        %s130 = scalar_lea.sflag [#allocation3], %s129
        %s131 = sand.u32 %s40, 1
        %s132 = smul.addr %s131, 6
        %s133 = scalar_lea.vmem [#allocation2], %s132
        // Predicated region
        $region25: #{tpu_custom_call.1} parent=23 // pred_check
          %p134 = pneg %p53
        $region26: #{tpu_custom_call.1} parent=23 // pred_check_branch
          %136 = sbr.rel (%p134) target = $region28
        $region27: #{tpu_custom_call.1} parent=23 // pred_region
          %137 = dma.done %s130, 96
        $region28: #{tpu_custom_call.1} parent=23 // pred_fallthru
          _
        %s138 = sand.u32 %s40, 1
        %s139 = scalar_lea.sflag [#allocation3], %s138
        %s140 = sand.u32 %s40, 1
        %s141 = smul.addr %s140, 6
        %s142 = scalar_lea.vmem [#allocation2], %s141
        %p143 = pneg %p53
        %p144 = pneg %p50
        %p145 = pneg %p81
        %p146 = pneg %p78
        %s147 = sand.u32 %s68, 1
        %s148 = scalar_lea.sflag [#allocation4], %s147
        %s149 = sand.u32 %s68, 1
        %s150 = smul.addr %s149, 6
        %s151 = scalar_lea.vmem [#allocation5], %s150
        %v152 = vld [vmem:[%s133] sm:$0x3]
        %v153 = vld [vmem:[%s133 + $0x2] sm:$0x3]
        %v154 = vld [vmem:[%s133 + $0x4] sm:$0x3]
        %vm155 = vcmp.le.f32.partialorder %v152, 0.04045
        %vm156 = vcmp.le.f32.partialorder %v153, 0.04045
        %vm157 = vcmp.le.f32.partialorder %v154, 0.04045
        %v158 = vmul.f32 %v152, 0.07739938
        %v159 = vmul.f32 %v153, 0.07739938
        %v160 = vmul.f32 %v154, 0.07739938
        %v161 = vadd.f32 %v152, 0.055
        %v162 = vadd.f32 %v153, 0.055
        %v163 = vadd.f32 %v154, 0.055
        %v164 = vmul.f32 %v161, 0.9478673
        %v165 = vmul.f32 %v162, 0.9478673
        %v166 = vmul.f32 %v163, 0.9478673
        %v167 = vpow.f32 %v164, 2.4
        %v168 = vpow.f32 %v165, 2.4
        %v169 = vpow.f32 %v166, 2.4
        %v170 = vsel %vm155, %v158, %v167
        %v171 = vsel %vm156, %v159, %v168
        %v172 = vsel %vm157, %v160, %v169
        %v173 = vmul.f32 %v170, 7.312359
        %v174 = vmul.f32 %v171, 57.869057
        %v175 = vadd.f32 %v173, %v174
        %v176 = vmul.f32 %v172, 4.99169
        %v177 = vadd.f32 %v175, %v176
        %v178 = vround.ne.pseudo %v177
        %v179 = vmul.f32 %v178, 0.0076550636
        %v180 = vand.u32 2147483647, %v179
        %v181 = vmin.f32 %v180, 1.0
        %182 = vst [vmem:[%s151] sm:$0x3] %v181
        %v183 = vmul.f32 %v170, 5.2526917
        %v184 = vmul.f32 %v171, 41.56912
        %v185 = vadd.f32 %v183, %v184
        %v186 = vmul.f32 %v172, 3.585684
        %v187 = vadd.f32 %v185, %v186
        %v188 = vround.ne.pseudo %v187
        %v189 = vmul.f32 %v188, 0.0054129474
        %v190 = vand.u32 2147483647, %v189
        %v191 = vmin.f32 %v190, 1.0
        %s192 = scalar_lea.vmem %s151, 2 [#allocation5]
        %193 = vst [vmem:[%s192] sm:$0x3] %v191
        %v194 = vmul.f32 %v170, 0.49943116
        %v195 = vmul.f32 %v171, 1.2665302
        %v196 = vadd.f32 %v194, %v195
        %v197 = vmul.f32 %v172, 14.5463
        %v198 = vadd.f32 %v196, %v197
        %v199 = vround.ne.pseudo %v198
        %v200 = vmul.f32 %v199, 0.0015811388
        %v201 = vand.u32 2147483647, %v200
        %v202 = vmin.f32 %v201, 1.0
        %s203 = scalar_lea.vmem %s151, 4 [#allocation5]
        %204 = vst [vmem:[%s203] sm:$0x3] %v202
        %s205 = sand.u32 %s68, 1
        %s206 = scalar_lea.sflag [#allocation4], %s205
        %s207 = sand.u32 %s68, 1
        %s208 = smul.addr %s207, 6
        %s209 = scalar_lea.vmem [#allocation5], %s208
        // Predicated region
        $region29: #{tpu_custom_call.1} parent=23 // pred_check
          %p210 = pneg %p78
        $region30: #{tpu_custom_call.1} parent=23 // pred_check_branch
          %212 = sbr.rel (%p210) target = $region32
        $region31: #{tpu_custom_call.1} parent=23 // pred_region
          %s214 = ssub.s32 96, 96
          %215 = vsyncadd %s206, %s214
          %s216 = smul.addr %s22, 3
          %s217 = sadd.s32 %s23, %s216
          %s218 = smul.addr %s217, 32
          %s219 = scalar_lea.hbm %s1, %s218
          %s220 = sshll.u32 %s209, 4
          %s221 = int_to_ptr.vmem [resolvable:$true] %s220
          %226 = dma.vmem_to_hbm [thread:$0]  %s221, 96, %s219, %s206, 32, 32, 2
        $region32: #{tpu_custom_call.1} parent=23 // pred_fallthru
          _
      $region24: #{tpu_custom_call.1} parent=5 // pred_fallthru
        _
      %p227 = scmp.le.s32.totalorder 2, %s13
      // Predicated region
      $region33: #{tpu_custom_call.1} parent=5 // pred_check
        %p228 = pneg %p227
      $region34: #{tpu_custom_call.1} parent=5 // pred_check_branch
        %230 = sbr.rel (%p228) target = $region36
      $region35: #{tpu_custom_call.1} parent=5 // pred_region
        %s231 = ssub.s32 %s13, 2
        // Predicated region
        $region37: #{tpu_custom_call.1} parent=35 // pred_check
          %p232 = pneg %p84
        $region38: #{tpu_custom_call.1} parent=35 // pred_check_branch
          %234 = sbr.rel (%p232) target = $region40
        $region39: #{tpu_custom_call.1} parent=35 // pred_region
          %s235 = sand.u32 %s69, 1
          %s236 = scalar_lea.sflag [#allocation4], %s235
          %s237 = sand.u32 %s69, 1
          %s238 = smul.addr %s237, 6
          %s239 = scalar_lea.vmem [#allocation5], %s238
          %240 = dma.done %s236, 96
        $region40: #{tpu_custom_call.1} parent=35 // pred_fallthru
          _
      $region36: #{tpu_custom_call.1} parent=5 // pred_fallthru
        _
    $region6: #{tpu_custom_call.1} parent=1 // loop_footer
      %s17 = sadd.s32 1, %s13
    $region7: #{tpu_custom_call.1} parent=1 // loop_footer_branch
      %12 = sbr.rel target = $region3
    $region8: #{tpu_custom_call.1} parent=1 // loop_exit
      _
    %241 = vsyncpa [#allocation3], 1
    %s242 = scalar_lea.sflag [#allocation3], 1
    %243 = vsyncpa %s242, 1
    %244 = vsyncpa [#allocation4], 1
    %s245 = scalar_lea.sflag [#allocation4], 1
    %246 = vsyncpa %s245, 1

</llo_original>
